<compile_context>
chip_gen: v7x
topology: tpu7x:2x2x1
jax: 0.10.0
libtpu: 0.0.40
codegen_flags: <defaults>
</compile_context>

<pallas_src>
import functools

import jax
import jax.numpy as jnp
from jax import lax
from jax.experimental import pallas as pl
from jax.experimental.pallas import tpu as pltpu


# ---------------------------------------------------------------------------
# Kernels
# ---------------------------------------------------------------------------
def _residual_linear_fused_kernel(x_ref, w_ref, b_ref, o_ref, *, tn):
    """Single-K-step path: TK == Hp, residual sliced from the resident x block.

    x_ref : (TM, Hp)  matmul LHS (and residual source), block (i, 0)
    w_ref : (TN, Hp)  weight, PyTorch [out, in] layout, block (j, 0)
    b_ref : (1,  TN)  bias, block (0, j)
    o_ref : (TM, TN)  output, block (i, j)
    """
    j = pl.program_id(1)

    # x @ W^T : contract last dims of both operands, f32 accumulate on MXU.
    y = lax.dot_general(
        x_ref[...], w_ref[...],
        dimension_numbers=(((1,), (1,)), ((), ())),
        preferred_element_type=jnp.float32)

    # Residual columns come straight from the x block already in VMEM —
    # no second HBM stream of x.
    col0 = pl.multiple_of(j * tn, 128)
    res = x_ref[:, pl.ds(col0, tn)]

    y = y + b_ref[...].astype(jnp.float32) + res.astype(jnp.float32)
    o_ref[...] = y.astype(o_ref.dtype)


def _residual_linear_ktiled_kernel(x_ref, w_ref, b_ref, xres_ref, o_ref,
                                   acc_ref):
    """K-tiled path (reduction over k, innermost 'arbitrary' grid axis).

    x_ref   : (TM, TK)  matmul LHS block               (i, k)
    w_ref   : (TN, TK)  weight block [out, in] layout  (j, k)
    b_ref   : (1,  TN)  bias block                     (0, j)
    xres_ref: (TM, TN)  residual block of x            (i, j)  (k-invariant)
    o_ref   : (TM, TN)  output block                   (i, j)
    acc_ref : (TM, TN)  f32 VMEM accumulator, resident across k
    """
    k = pl.program_id(2)

    @pl.when(k == 0)
    def _init():
        # Fold residual + bias into the accumulator init (saves a zero-store
        # and an extra f32 add pass in the epilogue).
        acc_ref[...] = (xres_ref[...].astype(jnp.float32)
                        + b_ref[...].astype(jnp.float32))

    acc_ref[...] += lax.dot_general(
        x_ref[...], w_ref[...],
        dimension_numbers=(((1,), (1,)), ((), ())),
        preferred_element_type=jnp.float32)

    @pl.when(k == pl.num_programs(2) - 1)
    def _epilogue():
        o_ref[...] = acc_ref[...].astype(o_ref.dtype)


# ---------------------------------------------------------------------------
# Tiling helpers
# ---------------------------------------------------------------------------
def _round_up(v, m):
    return ((v + m - 1) // m) * m


def _pick_divisor_tile(dim, target, align):
    """Largest multiple of `align` that divides `dim` and is <= target.

    `dim` must itself be a multiple of `align`, so the search always
    terminates at >= align (no monolithic-block fallback).
    """
    assert dim % align == 0
    if dim <= target:
        return dim
    t = (target // align) * align
    while t > align and dim % t != 0:
        t -= align
    return t


# ---------------------------------------------------------------------------
# Wrapper
# ---------------------------------------------------------------------------
def residual_linear(x, w, b, *, mxu_dtype=jnp.bfloat16, out_dtype=None,
                    tm=768, tn=768, tk=512,
                    vmem_limit_bytes=48 * 1024 * 1024):
    """Fused Residual(Linear): y = x @ w.T + b + x.

    x: (..., H), w: (H, H) (PyTorch Linear weight [out, in]), b: (H,).

    mxu_dtype=bf16 streams x/W to the MXU in bf16 (f32 accumulate); the bias
    (and, on the K-tiled path, the residual) stay in full precision.  Pass
    mxu_dtype=None for an all-f32 path (tight numerical parity).
    Per-generation tuning: v5e ~ tm=tn=512, tk=1024; v6e ~ tm=tn=1024-1536;
    v7x ~ tm=tn=768 with vmem_limit <= ~56 MiB (defaults are safe everywhere).
    """
    orig_shape = x.shape
    H = orig_shape[-1]
    x2d = x.reshape(-1, H)
    M = x2d.shape[0]
    assert w.shape == (H, H) and b.shape == (H,)
    out_dtype = x.dtype if out_dtype is None else out_dtype

    # ---- pad H to a multiple of 128 (lane-dense output, full MXU lanes) ----
    Hp = _round_up(H, 128)
    TN = _pick_divisor_tile(Hp, tn, 128)
    TK = _pick_divisor_tile(Hp, tk, 128)

    # ---- bounded, 8-aligned TM; pad M so TM always divides it -------------
    M8 = _round_up(M, 8)
    TM = _pick_divisor_tile(M8, tm, 8)
    if TM < min(tm, 256):
        # No reasonable aligned divisor — pad M up to a full tile instead of
        # falling back to a huge monolithic block (VMEM-unsafe) or tiny tiles.
        TM = min((tm // 8) * 8, M8)
        Mp = _round_up(M, TM)
    else:
        Mp = M8

    pad_m, pad_h = Mp - M, Hp - H
    xp = jnp.pad(x2d, ((0, pad_m), (0, pad_h))) if (pad_m or pad_h) else x2d
    wp = jnp.pad(w, ((0, pad_h), (0, pad_h))) if pad_h else w
    bp = jnp.pad(b, (0, pad_h)) if pad_h else b

    # Cast operands ONCE in the wrapper (bf16 HBM streams), not per k-step.
    x_mxu = xp.astype(mxu_dtype) if mxu_dtype is not None else xp
    w_mxu = wp.astype(mxu_dtype) if mxu_dtype is not None else wp
    b2 = bp.reshape(1, Hp)

    grid_m, grid_n, grid_k = Mp // TM, Hp // TN, Hp // TK

    if grid_k == 1:
        # ---- fused single-K-step path: residual sliced from x block -------
        kernel = functools.partial(_residual_linear_fused_kernel, tn=TN)
        out = pl.pallas_call(
            kernel,
            out_shape=jax.ShapeDtypeStruct((Mp, Hp), out_dtype),
            grid_spec=pltpu.PrefetchScalarGridSpec(
                num_scalar_prefetch=0,
                grid=(grid_m, grid_n),
                in_specs=[
                    pl.BlockSpec((TM, Hp), lambda i, j: (i, 0)),  # x (LHS+res)
                    pl.BlockSpec((TN, Hp), lambda i, j: (j, 0)),  # W [out, in]
                    pl.BlockSpec((1, TN), lambda i, j: (0, j)),   # bias
                ],
                out_specs=pl.BlockSpec((TM, TN), lambda i, j: (i, j)),
            ),
            compiler_params=pltpu.CompilerParams(
                dimension_semantics=("parallel", "parallel"),
                vmem_limit_bytes=vmem_limit_bytes,
            ),
        )(x_mxu, w_mxu, b2)
    else:
        # ---- K-tiled path: f32 accumulator resident across k --------------
        out = pl.pallas_call(
            _residual_linear_ktiled_kernel,
            out_shape=jax.ShapeDtypeStruct((Mp, Hp), out_dtype),
            grid_spec=pltpu.PrefetchScalarGridSpec(
                num_scalar_prefetch=0,
                grid=(grid_m, grid_n, grid_k),
                in_specs=[
                    pl.BlockSpec((TM, TK), lambda i, j, k: (i, k)),  # x
                    pl.BlockSpec((TN, TK), lambda i, j, k: (j, k)),  # W
                    pl.BlockSpec((1, TN), lambda i, j, k: (0, j)),   # bias
                    pl.BlockSpec((TM, TN), lambda i, j, k: (i, j)),  # residual
                ],
                out_specs=pl.BlockSpec((TM, TN), lambda i, j, k: (i, j)),
                scratch_shapes=[pltpu.VMEM((TM, TN), jnp.float32)],
            ),
            compiler_params=pltpu.CompilerParams(
                dimension_semantics=("parallel", "parallel", "arbitrary"),
                vmem_limit_bytes=vmem_limit_bytes,
            ),
        )(x_mxu, w_mxu, b2, xp)

    if pad_m or pad_h:
        out = out[:M, :H]
    return out.reshape(orig_shape)


# ---------------------------------------------------------------------------
# Self-test
# ---------------------------------------------------------------------------
if __name__ == "__main__":
    # TODO(synk): the reference `Residual` wraps an arbitrary `fn`; we
    # instantiate it concretely as nn.Linear(hidden, hidden).
    def ref_fn(x, w, b):
        return jnp.einsum("...h,oh->...o", x, w) + b + x

    key = jax.random.PRNGKey(0)

    # Case 1: module demo shape (batch=2, seq=8, hidden=32).  Exercises the
    # fused single-K-step path with H padded 32 -> 128 for lane density.
    batch, seq, hidden = 2, 8, 32
    k1, k2, k3, key = jax.random.split(key, 4)
    x = jax.random.normal(k1, (batch, seq, hidden), dtype=jnp.float32)
    w = jax.random.normal(k2, (hidden, hidden), dtype=jnp.float32) * 0.05
    b = jax.random.normal(k3, (hidden,), dtype=jnp.float32) * 0.05
    ref = ref_fn(x, w, b)

    out_f32 = jax.block_until_ready(residual_linear(x, w, b, mxu_dtype=None))
    assert out_f32.shape == x.shape and out_f32.dtype == x.dtype
    assert jnp.allclose(out_f32, ref, atol=1e-3, rtol=1e-3), "fused f32 mismatch"

    out_bf16 = jax.block_until_ready(residual_linear(x, w, b))
    assert jnp.allclose(out_bf16, ref, atol=3e-2, rtol=3e-2), "fused bf16 mismatch"

    # Case 2: hidden > TK exercises the K-tiled accumulator path.
    hidden2 = 640
    k1, k2, k3, key = jax.random.split(key, 4)
    x2 = jax.random.normal(k1, (2, 8, hidden2), dtype=jnp.float32)
    w2 = jax.random.normal(k2, (hidden2, hidden2), dtype=jnp.float32) * 0.05
    b2 = jax.random.normal(k3, (hidden2,), dtype=jnp.float32) * 0.05
    ref2 = ref_fn(x2, w2, b2)

    out2_f32 = jax.block_until_ready(residual_linear(x2, w2, b2, mxu_dtype=None))
    assert jnp.allclose(out2_f32, ref2, atol=3e-2, rtol=3e-2), "ktiled f32 mismatch"

    out2_bf16 = jax.block_until_ready(residual_linear(x2, w2, b2))
    assert jnp.allclose(out2_bf16, ref2, atol=3e-2, rtol=3e-2), "ktiled bf16 mismatch"

    print("KERNEL_OK")
</pallas_src>

<mosaic_0001>
module attributes {stable_mosaic.version = 11 : i64} {
  func.func @_residual_linear_fused_kernel(%arg0: i32, %arg1: i32, %arg2: memref<16x128xf32, #tpu.memory_space<vmem>>, %arg3: memref<128x128xf32, #tpu.memory_space<vmem>>, %arg4: memref<1x128xf32, #tpu.memory_space<vmem>>, %arg5: memref<16x128xf32, #tpu.memory_space<vmem>>) attributes {dimension_semantics = [#tpu.dimension_semantics<parallel>, #tpu.dimension_semantics<parallel>], iteration_bounds = array<i64: 1, 1>, scalar_prefetch = 0 : i64, scratch_operands = 0 : i64, tpu.core_type = #tpu.core_type<tc>, window_params = [{transform_indices = @transform_0, window_bounds = array<i64: 16, 128>}, {transform_indices = @transform_1, window_bounds = array<i64: 128, 128>}, {transform_indices = @transform_2, window_bounds = array<i64: 1, 128>}, {transform_indices = @transform_3, window_bounds = array<i64: 16, 128>}]} {
    %c0 = arith.constant 0 : index
    %c0_0 = arith.constant 0 : index
    %0 = vector.load %arg2[%c0, %c0_0] : memref<16x128xf32, #tpu.memory_space<vmem>>, vector<16x128xf32>
    %c0_1 = arith.constant 0 : index
    %c0_2 = arith.constant 0 : index
    %1 = vector.load %arg3[%c0_1, %c0_2] : memref<128x128xf32, #tpu.memory_space<vmem>>, vector<128x128xf32>
    %cst = arith.constant dense<0.000000e+00> : vector<16x128xf32>
    %2 = tpu.matmul %0, %1, %cst {dimension_numbers = #tpu.dot_dimension_numbers<[1], [1], [0], [0], [0, 0, 1, 0], [], []>} : vector<16x128xf32>, vector<128x128xf32>, vector<16x128xf32> -> vector<16x128xf32>
    %c128_i32 = arith.constant 128 : i32
    %3 = arith.muli %arg1, %c128_i32 : i32
    %4 = tpu.assume_multiple %3, 128 : i32
    %c0_3 = arith.constant 0 : index
    %5 = arith.index_cast %4 : i32 to index
    %6 = vector.load %arg2[%c0_3, %5] : memref<16x128xf32, #tpu.memory_space<vmem>>, vector<16x128xf32>
    %c0_4 = arith.constant 0 : index
    %c0_5 = arith.constant 0 : index
    %7 = vector.load %arg4[%c0_4, %c0_5] : memref<1x128xf32, #tpu.memory_space<vmem>>, vector<1x128xf32>
    %8 = vector.broadcast %7 : vector<1x128xf32> to vector<16x128xf32>
    %9 = arith.addf %2, %8 : vector<16x128xf32>
    %10 = arith.addf %9, %6 : vector<16x128xf32>
    %c0_6 = arith.constant 0 : index
    %c0_7 = arith.constant 0 : index
    %11 = vector.load %arg5[%c0_6, %c0_7] : memref<16x128xf32, #tpu.memory_space<vmem>>, vector<16x128xf32>
    tpu.vector_store %arg5[%c0_6, %c0_7], %10 {strides = array<i32>} : memref<16x128xf32, #tpu.memory_space<vmem>>, vector<16x128xf32>,
    return
  }
  func.func @transform_0(%arg0: i32, %arg1: i32) -> (i32, i32) {
    %c0_i32 = arith.constant 0 : i32
    %c0_i32_0 = arith.constant 0 : i32
    return %arg0, %c0_i32 : i32, i32
  }
  func.func @transform_1(%arg0: i32, %arg1: i32) -> (i32, i32) {
    %c0_i32 = arith.constant 0 : i32
    %c0_i32_0 = arith.constant 0 : i32
    return %arg1, %c0_i32 : i32, i32
  }
  func.func @transform_2(%arg0: i32, %arg1: i32) -> (i32, i32) {
    %c0_i32 = arith.constant 0 : i32
    %c0_i32_0 = arith.constant 0 : i32
    return %c0_i32, %arg1 : i32, i32
  }
  func.func @transform_3(%arg0: i32, %arg1: i32) -> (i32, i32) {
    %c0_i32 = arith.constant 0 : i32
    return %arg0, %arg1 : i32, i32
  }
}

</mosaic_0001>

<llo_original>
// kernel: tpu_custom_call.1
$region0: #{tpu_custom_call.1}
  #allocation0 [shape = 'u32[]', space=smem, size = 0x4, offset = 0x4, fixed_abs, tag = 'smem constant byte address 0x4 - core index']
  #allocation1 [shape = 'u32[144,128]{1,0:T(1,128)}', space=vmem, size = 0x12000, scoped, tag = 'internal scratch']
  %s0 = inlined_call_operand.hbm [shape: f32[16,128], index: 0, kind: input, shape index: {}]
  %s1 = inlined_call_operand.hbm [shape: f32[128,128], index: 1, kind: input, shape index: {}]
  %s2 = inlined_call_operand.vmem [shape: f32[1,128], index: 2, kind: input, shape index: {}]
  %s3 = inlined_call_operand.hbm [shape: f32[16,128], index: 3, kind: output, shape index: {}]
  %s4 = sld [smem:[#allocation0]]
  $region30: #{tpu_custom_call.1} parent=0
    _
  %s6 = ssub.s32 1, %s4
  %s7 = scalar_select 0, %s6, %s4
  $region1: #{tpu_custom_call.1} parent=0
    #allocation2 [shape = 'u8[8192]{0}', space=vmem, size = 0x2000, scoped, tag = 'input window, operand 0, single buffered']
    #allocation3 [shape = 's32[1]{0}', space=sflag, size = 0x4, scoped, tag = 'scoped memory for tpu_custom_call.1']
    #allocation4 [shape = 's32[1]{0}', space=sflag, size = 0x4, scoped, tag = 'scoped memory for tpu_custom_call.1']
    #allocation5 [shape = 'u8[65536]{0}', space=vmem, size = 0x10000, scoped, tag = 'input window, operand 1, single buffered']
    #allocation6 [shape = 's32[1]{0}', space=sflag, size = 0x4, scoped, tag = 'scoped memory for tpu_custom_call.1']
    #allocation7 [shape = 'u8[8192]{0}', space=vmem, size = 0x2000, scoped, tag = 'output window, operand 0, single buffered']
    %8 = vsyncpa [#allocation3], 0
    %9 = vsyncpa [#allocation6], 0
    %10 = vsyncpa [#allocation4], 0
    // Predicated region
    $region2: #{tpu_custom_call.1} parent=1 // pred_check
      _
    $region3: #{tpu_custom_call.1} parent=1 // pred_check_branch
      %12 = sbr.rel (0) target = $region5
    $region4: #{tpu_custom_call.1} parent=1 // pred_region
      %s14 = ssub.s32 256, 256
      %15 = vsyncadd [#allocation3], %s14
      %s16 = sshll.u32 [#allocation2], 4
      %s17 = int_to_ptr.vmem [resolvable:$true] %s16
      %22 = dma.hbm_to_vmem [thread:$0]  %s0, 256, %s17, [#allocation3], 128, 128, 8
    $region5: #{tpu_custom_call.1} parent=1 // pred_fallthru
      _
    // Predicated region
    $region6: #{tpu_custom_call.1} parent=1 // pred_check
      _
    $region7: #{tpu_custom_call.1} parent=1 // pred_check_branch
      %24 = sbr.rel (0) target = $region9
    $region8: #{tpu_custom_call.1} parent=1 // pred_region
      %s26 = ssub.s32 2048, 2048
      %27 = vsyncadd [#allocation6], %s26
      %s28 = sshll.u32 [#allocation5], 4
      %s29 = int_to_ptr.vmem [resolvable:$true] %s28
      %34 = dma.hbm_to_vmem [thread:$0]  %s1, 2048, %s29, [#allocation6], 128, 128, 8
    $region9: #{tpu_custom_call.1} parent=1 // pred_fallthru
      _
    // Predicated region
    $region10: #{tpu_custom_call.1} parent=1 // pred_check
      _
    $region11: #{tpu_custom_call.1} parent=1 // pred_check_branch
      %36 = sbr.rel (0) target = $region13
    $region12: #{tpu_custom_call.1} parent=1 // pred_region
      _
    $region13: #{tpu_custom_call.1} parent=1 // pred_fallthru
      _
    // Predicated region
    $region14: #{tpu_custom_call.1} parent=1 // pred_check
      _
    $region15: #{tpu_custom_call.1} parent=1 // pred_check_branch
      %38 = sbr.rel (0) target = $region17
    $region16: #{tpu_custom_call.1} parent=1 // pred_region
      %39 = dma.done [#allocation3], 256
    $region17: #{tpu_custom_call.1} parent=1 // pred_fallthru
      _
    // Predicated region
    $region18: #{tpu_custom_call.1} parent=1 // pred_check
      _
    $region19: #{tpu_custom_call.1} parent=1 // pred_check_branch
      %41 = sbr.rel (0) target = $region21
    $region20: #{tpu_custom_call.1} parent=1 // pred_region
      %42 = dma.done [#allocation6], 2048
    $region21: #{tpu_custom_call.1} parent=1 // pred_fallthru
      _
    %v43 = vld [vmem:[#allocation2] sm:$0xff]
    %v44 = vld [vmem:[#allocation2 + $0x8] sm:$0xff]
    %v45 = vld [vmem:[#allocation5] sm:$0xff]
    %v46 = vld [vmem:[#allocation5 + $0x8] sm:$0xff]
    %v47 = vld [vmem:[#allocation5 + $0x10] sm:$0xff]
    %v48 = vld [vmem:[#allocation5 + $0x18] sm:$0xff]
    %v49 = vld [vmem:[#allocation5 + $0x20] sm:$0xff]
    %v50 = vld [vmem:[#allocation5 + $0x28] sm:$0xff]
    %v51 = vld [vmem:[#allocation5 + $0x30] sm:$0xff]
    %v52 = vld [vmem:[#allocation5 + $0x38] sm:$0xff]
    %v53 = vld [vmem:[#allocation5 + $0x40] sm:$0xff]
    %v54 = vld [vmem:[#allocation5 + $0x48] sm:$0xff]
    %v55 = vld [vmem:[#allocation5 + $0x50] sm:$0xff]
    %v56 = vld [vmem:[#allocation5 + $0x58] sm:$0xff]
    %v57 = vld [vmem:[#allocation5 + $0x60] sm:$0xff]
    %v58 = vld [vmem:[#allocation5 + $0x68] sm:$0xff]
    %v59 = vld [vmem:[#allocation5 + $0x70] sm:$0xff]
    %v60 = vld [vmem:[#allocation5 + $0x78] sm:$0xff]
    %s61 = smul.u32 0, 128
    %s62 = sshra.s32 %s61, 7
    %s63 = sand.u32 %s61, 127
    %s64 = scalar_lea.vmem [#allocation2], %s62
    %v65 = vld [vmem:[%s64] sm:$0xff]
    %v66 = vld [vmem:[%s64 + $0x8] sm:$0xff]
    %v67 = vld [vmem:[%s2] sm:$0x1]
    %v69 = vlaneseq
    %v70 = vshrl.u32 %v69, 7
    %v71 = vsub.s32 0, %v70
    %v72 = vrot.slane %v67, %v71
    %74 = vmatprep.subr.mxu0 0.0
    %75 = vmatpush1.xpose.msra.mxu0 %v45
    %76 = vmatprep.subr.mxu0 0.0
    %77 = vmatpush1.xpose.msra.mxu0 %v46
    %78 = vmatprep.subr.mxu0 0.0
    %79 = vmatpush1.xpose.msra.mxu0 %v47
    %80 = vmatprep.subr.mxu0 0.0
    %81 = vmatpush1.xpose.msra.mxu0 %v48
    %82 = vmatprep.subr.mxu0 0.0
    %83 = vmatpush1.xpose.msra.mxu0 %v49
    %84 = vmatprep.subr.mxu0 0.0
    %85 = vmatpush1.xpose.msra.mxu0 %v50
    %86 = vmatprep.subr.mxu0 0.0
    %87 = vmatpush1.xpose.msra.mxu0 %v51
    %88 = vmatprep.subr.mxu0 0.0
    %89 = vmatpush1.xpose.msra.mxu0 %v52
    %90 = vmatprep.subr.mxu0 0.0
    %91 = vmatpush1.xpose.msra.mxu0 %v53
    %92 = vmatprep.subr.mxu0 0.0
    %93 = vmatpush1.xpose.msra.mxu0 %v54
    %94 = vmatprep.subr.mxu0 0.0
    %95 = vmatpush1.xpose.msra.mxu0 %v55
    %96 = vmatprep.subr.mxu0 0.0
    %97 = vmatpush1.xpose.msra.mxu0 %v56
    %98 = vmatprep.subr.mxu0 0.0
    %99 = vmatpush1.xpose.msra.mxu0 %v57
    %100 = vmatprep.subr.mxu0 0.0
    %101 = vmatpush1.xpose.msra.mxu0 %v58
    %102 = vmatprep.subr.mxu0 0.0
    %103 = vmatpush1.xpose.msra.mxu0 %v59
    %104 = vmatprep.subr.mxu0 0.0
    %105 = vmatpush1.xpose.msra.mxu0 %v60
    %106 = vmatprep.subr.mxu0 0.0
    %107 = vmatpush1.xpose.msra.mxu0 0.0
    %108 = vmatprep.subr.mxu0 0.0
    %109 = vmatpush1.xpose.msra.mxu0 0.0
    %110 = vmatprep.subr.mxu0 0.0
    %111 = vmatpush1.xpose.msra.mxu0 0.0
    %112 = vmatprep.subr.mxu0 0.0
    %113 = vmatpush1.xpose.msra.mxu0 0.0
    %114 = vmatprep.subr.mxu0 0.0
    %115 = vmatpush1.xpose.msra.mxu0 0.0
    %116 = vmatprep.subr.mxu0 0.0
    %117 = vmatpush1.xpose.msra.mxu0 0.0
    %118 = vmatprep.subr.mxu0 0.0
    %119 = vmatpush1.xpose.msra.mxu0 0.0
    %120 = vmatprep.subr.mxu0 0.0
    %121 = vmatpush1.xpose.msra.mxu0 0.0
    %122 = vmatprep.subr.mxu0 0.0
    %123 = vmatpush1.xpose.msra.mxu0 0.0
    %124 = vmatprep.subr.mxu0 0.0
    %125 = vmatpush1.xpose.msra.mxu0 0.0
    %126 = vmatprep.subr.mxu0 0.0
    %127 = vmatpush1.xpose.msra.mxu0 0.0
    %128 = vmatprep.subr.mxu0 0.0
    %129 = vmatpush1.xpose.msra.mxu0 0.0
    %130 = vmatprep.subr.mxu0 0.0
    %131 = vmatpush1.xpose.msra.mxu0 0.0
    %132 = vmatprep.subr.mxu0 0.0
    %133 = vmatpush1.xpose.msra.mxu0 0.0
    %134 = vmatprep.subr.mxu0 0.0
    %135 = vmatpush1.xpose.msra.mxu0 0.0
    %136 = vmatprep.subr.mxu0 0.0
    %137 = vmatpush1.xpose.msra.mxu0 0.0
    %138 = vmatprep.mubr.f32.mxu0 0.0
    %139 = vmatmul.mubr.f32.gmra.mrb[0].mxu0 %v43
    %v140 = vpop.f32.mrb[0].mxu0
    %v141 = vadd.f32 %v72, %v140
    %v142 = vpop.f32.mrb[0].mxu0
    %143 = vmatprep.mubr.f32.mxu0 0.0
    %144 = vmatmul.mubr.f32.gmra.mrb[0].mxu0 %v44
    %v145 = vpop.f32.mrb[0].mxu0
    %v146 = vadd.f32 %v72, %v145
    %v147 = vpop.f32.mrb[0].mxu0
    %148 = vdwg.mxu0
    %v149 = vadd.f32 %v141, %v65
    %v150 = vadd.f32 %v146, %v66
    %151 = vst [vmem:[#allocation7] sm:$0xff] %v149
    %152 = vst [vmem:[#allocation7 + $0x8] sm:$0xff] %v150
    // Predicated region
    $region22: #{tpu_custom_call.1} parent=1 // pred_check
      _
    $region23: #{tpu_custom_call.1} parent=1 // pred_check_branch
      %154 = sbr.rel (0) target = $region25
    $region24: #{tpu_custom_call.1} parent=1 // pred_region
      %s156 = ssub.s32 256, 256
      %157 = vsyncadd [#allocation4], %s156
      %s158 = sshll.u32 [#allocation7], 4
      %s159 = int_to_ptr.vmem [resolvable:$true] %s158
      %164 = dma.vmem_to_hbm [thread:$0]  %s159, 256, %s3, [#allocation4], 128, 128, 8
    $region25: #{tpu_custom_call.1} parent=1 // pred_fallthru
      _
    // Predicated region
    $region26: #{tpu_custom_call.1} parent=1 // pred_check
      _
    $region27: #{tpu_custom_call.1} parent=1 // pred_check_branch
      %166 = sbr.rel (0) target = $region29
    $region28: #{tpu_custom_call.1} parent=1 // pred_region
      %167 = dma.done [#allocation4], 256
    $region29: #{tpu_custom_call.1} parent=1 // pred_fallthru
      _
    %168 = vsyncpa [#allocation3], 1
    %169 = vsyncpa [#allocation6], 1
    %170 = vsyncpa [#allocation4], 1

</llo_original>
